<compile_context>
chip_gen: v6e
topology: v6e:2x2x1
jax: 0.10.0
libtpu: 0.0.40
codegen_flags: <defaults>
</compile_context>

<pallas_src>
import jax
import jax.numpy as jnp
from jax.experimental import pallas as pl
from jax.experimental.pallas import tpu as pltpu


def _gemm_kernel(w_ref, x_ref, o_ref):
    # w_ref: (C_out, CKK_pad) bf16, resident across the grid (bias folded in).
    # x_ref: (CKK_pad, TN)    bf16, lane-dense column tile of one image's patches.
    # o_ref: (C_out, TN)      output dtype (f32), lane-dense -> unmasked stores.
    o_ref[...] = jnp.dot(
        w_ref[...], x_ref[...], preferred_element_type=jnp.float32
    ).astype(o_ref.dtype)


def _pick_col_tile(hw, bytes_per_col):
    """Largest lane-aligned (multiple of 128) column tile dividing HW, capped so the
    live x+out tile stays well inside v7x's VMEM budget (double-buffering doubles it).
    Falls back to a full-HW block when HW isn't lane-aligned (block == full dim is legal)."""
    if hw % 128 != 0:
        return hw
    budget = 8 << 20  # bytes for one x+out tile; ~16 MiB with double buffering
    max_tn = max(128, (budget // bytes_per_col) // 128 * 128)
    tn = min(hw, max_tn)
    while hw % tn != 0:
        tn -= 128
    return tn


def conv2d_same_pallas(x, weight, bias):
    """NCHW conv, SAME padding (odd K, stride 1), + bias, as one im2col GEMM.

    x: (N, C_in, H, W); weight: (C_out, C_in, K, K); bias: (C_out,).
    Returns (N, C_out, H, W).
    """
    n, c_in, h, w = x.shape
    c_out, _, k, _ = weight.shape
    pad = k // 2
    hw = h * w
    ckk = c_in * k * k
    ckk_pad = ((ckk + 1 + 127) // 128) * 128  # +1 slot for the bias ones-row, lane-aligned

    # ---- im2col (pure layout plumbing, plain JAX) ---------------------------
    xb = x.astype(jnp.bfloat16)  # cast BEFORE the 25x blow-up
    x_pad = jnp.pad(xb, ((0, 0), (0, 0), (pad, pad), (pad, pad)))
    windows = [x_pad[:, :, kh:kh + h, kw:kw + w]
               for kh in range(k) for kw in range(k)]        # each (N, C_in, H, W)
    patches = jnp.stack(windows, axis=2)                     # (N, C_in, K*K, H, W) - no post-transpose
    patches = patches.reshape(n, ckk, hw)                    # row order matches weight.reshape
    ones_row = jnp.ones((n, 1, hw), jnp.bfloat16)            # multiplies the bias column
    pad_rows = jnp.zeros((n, ckk_pad - ckk - 1, hw), jnp.bfloat16)
    patches = jnp.concatenate([patches, ones_row, pad_rows], axis=1)  # (N, CKK_pad, HW)

    w_flat = weight.reshape(c_out, ckk)                      # c*K*K + kh*K + kw row order
    w_pad = jnp.concatenate(
        [w_flat, bias.reshape(c_out, 1),
         jnp.zeros((c_out, ckk_pad - ckk - 1), w_flat.dtype)], axis=1
    ).astype(jnp.bfloat16)                                    # (C_out, CKK_pad)

    tn = _pick_col_tile(hw, bytes_per_col=ckk_pad * 2 + c_out * 4)
    tiles_per_image = hw // tn
    grid = (n, tiles_per_image)

    out = pl.pallas_call(
        _gemm_kernel,
        out_shape=jax.ShapeDtypeStruct((n, c_out, hw), x.dtype),
        grid_spec=pltpu.PrefetchScalarGridSpec(
            num_scalar_prefetch=0,
            grid=grid,
            in_specs=[
                # resident weights (+ folded bias)
                pl.BlockSpec((c_out, ckk_pad), lambda ni, j: (0, 0)),
                # one image's lane-dense patch column tile
                pl.BlockSpec((None, ckk_pad, tn), lambda ni, j: (ni, 0, j)),
            ],
            # output written directly in (N, C_out, HW) layout -> no post-GEMM relayout
            out_specs=pl.BlockSpec((None, c_out, tn), lambda ni, j: (ni, 0, j)),
        ),
        compiler_params=pltpu.CompilerParams(
            dimension_semantics=("parallel", "parallel")),
    )(w_pad, patches)

    return out.reshape(n, c_out, h, w)  # contiguous reshape, zero data movement


def pixel_shuffle(x, r):
    """NCHW pixel shuffle: (N, C*r*r, H, W) -> (N, C, H*r, W*r). Pure layout."""
    n, c_rr, h, w = x.shape
    c = c_rr // (r * r)
    x = x.reshape(n, c, r, r, h, w)
    x = jnp.transpose(x, (0, 1, 4, 2, 5, 3))  # (N, C, H, r, W, r)
    return x.reshape(n, c, h * r, w * r)


def conv_end_forward(x, weight, bias, ratio=2):
    y = conv2d_same_pallas(x, weight, bias)
    return pixel_shuffle(y, ratio)


if __name__ == "__main__":
    # Shapes consistent with the module: conv(in=4 -> out=8, k=5, same pad),
    # then PixelShuffle(2): (2, 8, 16, 16) -> (2, 2, 32, 32).
    N, C_IN, H, W = 2, 4, 16, 16
    C_OUT, K, RATIO = 8, 5, 2

    key = jax.random.PRNGKey(0)
    kx, kw, kb = jax.random.split(key, 3)
    x = jax.random.normal(kx, (N, C_IN, H, W), dtype=jnp.float32)
    weight = jax.random.normal(kw, (C_OUT, C_IN, K, K), dtype=jnp.float32) * 0.05
    bias = jax.random.normal(kb, (C_OUT,), dtype=jnp.float32) * 0.05

    out = conv_end_forward(x, weight, bias, ratio=RATIO)
    out = jax.block_until_ready(out)

    # Cross-check against XLA reference conv (f32) + pixel shuffle.
    ref_conv = jax.lax.conv_general_dilated(
        x, weight, window_strides=(1, 1), padding="SAME",
        dimension_numbers=("NCHW", "OIHW", "NCHW"))
    ref = pixel_shuffle(ref_conv + bias.reshape(1, C_OUT, 1, 1), RATIO)
    assert out.shape == (N, C_OUT // (RATIO * RATIO), H * RATIO, W * RATIO)
    # bf16 GEMM operands (f32 accumulation) -> relaxed tolerance vs f32 reference.
    assert jnp.allclose(out, ref, atol=2e-2, rtol=2e-2)

    print("KERNEL_OK")
</pallas_src>

<mosaic_0001>
module attributes {stable_mosaic.version = 11 : i64} {
  func.func @_gemm_kernel(%arg0: i32, %arg1: i32, %arg2: memref<8x128xbf16, #tpu.memory_space<vmem>>, %arg3: memref<1x128x256xbf16, #tpu.memory_space<vmem>>, %arg4: memref<1x8x256xf32, #tpu.memory_space<vmem>>) attributes {dimension_semantics = [#tpu.dimension_semantics<parallel>, #tpu.dimension_semantics<parallel>], iteration_bounds = array<i64: 2, 1>, scalar_prefetch = 0 : i64, scratch_operands = 0 : i64, tpu.core_type = #tpu.core_type<tc>, window_params = [{pipeline_mode = #tpu.pipeline_mode<synchronous>, transform_indices = @transform_0, window_bounds = array<i64: 8, 128>}, {transform_indices = @transform_1, window_bounds = array<i64: 1, 128, 256>}, {transform_indices = @transform_2, window_bounds = array<i64: 1, 8, 256>}]} {
    %c0 = arith.constant 0 : index
    %c0_0 = arith.constant 0 : index
    %0 = vector.load %arg2[%c0, %c0_0] : memref<8x128xbf16, #tpu.memory_space<vmem>>, vector<8x128xbf16>
    %c0_1 = arith.constant 0 : index
    %c0_2 = arith.constant 0 : index
    %c0_3 = arith.constant 0 : index
    %1 = vector.load %arg3[%c0_1, %c0_2, %c0_3] : memref<1x128x256xbf16, #tpu.memory_space<vmem>>, vector<1x128x256xbf16>
    %2 = vector.shape_cast %1 : vector<1x128x256xbf16> to vector<128x256xbf16>
    %cst = arith.constant dense<0.000000e+00> : vector<8x256xf32>
    %3 = tpu.matmul %0, %2, %cst {dimension_numbers = #tpu.dot_dimension_numbers<[1], [0], [0], [1], [0, 0, 1, 1], [], []>} : vector<8x128xbf16>, vector<128x256xbf16>, vector<8x256xf32> -> vector<8x256xf32>
    %c0_4 = arith.constant 0 : index
    %c0_5 = arith.constant 0 : index
    %c0_6 = arith.constant 0 : index
    %4 = vector.load %arg4[%c0_4, %c0_5, %c0_6] : memref<1x8x256xf32, #tpu.memory_space<vmem>>, vector<1x8x256xf32>
    %5 = vector.shape_cast %4 : vector<1x8x256xf32> to vector<8x256xf32>
    %6 = vector.shape_cast %3 : vector<8x256xf32> to vector<1x8x256xf32>
    tpu.vector_store %arg4[%c0_4, %c0_5, %c0_6], %6 {strides = array<i32>} : memref<1x8x256xf32, #tpu.memory_space<vmem>>, vector<1x8x256xf32>,
    return
  }
  func.func @transform_0(%arg0: i32, %arg1: i32) -> (i32, i32) {
    %c0_i32 = arith.constant 0 : i32
    %c0_i32_0 = arith.constant 0 : i32
    %c0_i32_1 = arith.constant 0 : i32
    return %c0_i32, %c0_i32_0 : i32, i32
  }
  func.func @transform_1(%arg0: i32, %arg1: i32) -> (i32, i32, i32) {
    %c0_i32 = arith.constant 0 : i32
    %c0_i32_0 = arith.constant 0 : i32
    return %arg0, %c0_i32, %arg1 : i32, i32, i32
  }
  func.func @transform_2(%arg0: i32, %arg1: i32) -> (i32, i32, i32) {
    %c0_i32 = arith.constant 0 : i32
    %c0_i32_0 = arith.constant 0 : i32
    return %arg0, %c0_i32, %arg1 : i32, i32, i32
  }
}

</mosaic_0001>

<llo_original>
// kernel: tpu_custom_call.1
$region0: #{tpu_custom_call.1}
  #allocation0 [shape = 'u32[]', space=smem, size = 0x4, offset = 0x4, fixed_abs, tag = 'smem constant byte address 0x4 - core index']
  #allocation1 [shape = 'u32[144,128]{1,0:T(1,128)}', space=vmem, size = 0x12000, scoped, tag = 'internal scratch']
  %s0 = inlined_call_operand.hbm [shape: bf16[8,128], index: 0, kind: input, shape index: {}]
  %s1 = inlined_call_operand.hbm [shape: bf16[2,128,256], index: 1, kind: input, shape index: {}]
  %s2 = inlined_call_operand.hbm [shape: f32[2,8,256], index: 2, kind: output, shape index: {}]
  %s3 = sld [smem:[#allocation0]]
  $region49: #{tpu_custom_call.1} parent=0
    _
  %s5 = ssub.s32 1, %s3
  %s6 = scalar_select 0, %s5, %s3
  $region1: #{tpu_custom_call.1} parent=0
    #allocation2 [shape = 'u8[2048]{0}', space=vmem, size = 0x800, scoped, tag = 'input window, operand 0, single buffered']
    #allocation3 [shape = 's32[2]{0}', space=sflag, size = 0x8, scoped, tag = 'scoped memory for tpu_custom_call.1']
    #allocation4 [shape = 's32[2]{0}', space=sflag, size = 0x8, scoped, tag = 'scoped memory for tpu_custom_call.1']
    #allocation5 [shape = 'u8[131072]{0}', space=vmem, size = 0x20000, scoped, tag = 'input window, operand 1']
    #allocation6 [shape = 's32[2]{0}', space=sflag, size = 0x8, scoped, tag = 'scoped memory for tpu_custom_call.1']
    #allocation7 [shape = 'u8[16384]{0}', space=vmem, size = 0x4000, scoped, tag = 'output window, operand 0']
    %7 = vsyncpa [#allocation3], 0
    %8 = vsyncpa [#allocation6], 0
    %s9 = scalar_lea.sflag [#allocation6], 1
    %10 = vsyncpa %s9, 0
    %11 = vsyncpa [#allocation4], 0
    %s12 = scalar_lea.sflag [#allocation4], 1
    %13 = vsyncpa %s12, 0
    loop: start=0, step=1, limit=4
    $region2: #{tpu_custom_call.1} parent=1 // loop_pre_header
      _
    $region3: #{tpu_custom_call.1} parent=1 // loop_header
      %s15 = sphi 0, %s19
      %p16 = scmp.ge.s32.totalorder %s15, 4
      %s22 = sphi 0, %s34
      %s23 = sphi 0, %s30
      %s24 = sphi 0, %s22
      %s25 = sphi 0, %s23
      %s26 = sphi 0, %s24
      %s27 = sphi 0, %s25
      %s35 = sphi 0, %s35
      %s37 = sphi 0, %s35
      %s38 = sphi 0, %s37
      %s52 = sphi 0, %s38
      %s60 = sphi 0, %s62
      %s63 = sphi 0, %s60
      %s64 = sphi 0, %s63
      %s80 = sphi 0, %s64
      %s88 = sphi 0, %s90
      %s91 = sphi 0, %s88
      %s92 = sphi 0, %s91
      %s108 = sphi 0, %s92
    $region4: #{tpu_custom_call.1} parent=1 // loop_header_branch
      %18 = sbr.rel (%p16) target = $region8
    $region5: #{tpu_custom_call.1} parent=1 // loop_body
      %s20 = ssub.s32 %s15, 1
      %s21 = ssub.s32 %s15, 2
      %s28 = sadd.s32 1, %s23
      %p29 = scmp.ge.s32.totalorder %s28, 1
      %s30 = scalar_select %p29, 0, %s28
      %s31 = sadd.s32 1, %s22
      %s32 = scalar_select %p29, %s31, %s22
      %p33 = scmp.ge.s32.totalorder %s32, 2
      %s34 = scalar_select %p33, 0, %s32
      %s36 = sadd.s32 %s35, 1
      %p39 = scmp.eq.s32.totalorder %s15, 1
      %p40 = scmp.ne.s32.totalorder %s35, %s37
      %p41 = scmp.eq.s32.totalorder %s15, 0
      %p42 = por %p40, %p41
      %p43 = scmp.ne.s32.totalorder %s35, %s37
      %p44 = scmp.eq.s32.totalorder %s20, 1
      %p45 = por %p43, %p44
      %p46 = scmp.ne.s32.totalorder %s37, %s38
      %p47 = scmp.eq.s32.totalorder %s20, 0
      %p48 = por %p46, %p47
      %p49 = scmp.ne.s32.totalorder %s37, %s38
      %p50 = scmp.eq.s32.totalorder %s21, 1
      %p51 = por %p49, %p50
      %p53 = scmp.ne.s32.totalorder %s38, %s52
      %p54 = scmp.eq.s32.totalorder %s21, 0
      %p55 = por %p53, %p54
      %s56 = ssub.s32 %s22, %s34
      %s57 = ssub.s32 %s23, %s30
      %s58 = sor.u32 %s56, %s57
      %p59 = scmp.eq.s32.totalorder %s58, 0
      %s61 = sadd.s32 %s60, 1
      %s62 = scalar_select %p59, %s60, %s61
      %p65 = pneg %p59
      %p66 = scmp.eq.s32.totalorder %s15, 1
      %p67 = por %p65, %p66
      %p68 = scmp.ne.s32.totalorder %s60, %s63
      %p69 = scmp.eq.s32.totalorder %s15, 0
      %p70 = por %p68, %p69
      %p71 = scmp.ne.s32.totalorder %s60, %s63
      %p72 = scmp.eq.s32.totalorder %s20, 1
      %p73 = por %p71, %p72
      %p74 = scmp.ne.s32.totalorder %s63, %s64
      %p75 = scmp.eq.s32.totalorder %s20, 0
      %p76 = por %p74, %p75
      %p77 = scmp.ne.s32.totalorder %s63, %s64
      %p78 = scmp.eq.s32.totalorder %s21, 1
      %p79 = por %p77, %p78
      %p81 = scmp.ne.s32.totalorder %s64, %s80
      %p82 = scmp.eq.s32.totalorder %s21, 0
      %p83 = por %p81, %p82
      %s84 = ssub.s32 %s22, %s34
      %s85 = ssub.s32 %s23, %s30
      %s86 = sor.u32 %s84, %s85
      %p87 = scmp.eq.s32.totalorder %s86, 0
      %s89 = sadd.s32 %s88, 1
      %s90 = scalar_select %p87, %s88, %s89
      %p93 = pneg %p87
      %p94 = scmp.eq.s32.totalorder %s15, 1
      %p95 = por %p93, %p94
      %p96 = scmp.ne.s32.totalorder %s88, %s91
      %p97 = scmp.eq.s32.totalorder %s15, 0
      %p98 = por %p96, %p97
      %p99 = scmp.ne.s32.totalorder %s88, %s91
      %p100 = scmp.eq.s32.totalorder %s20, 1
      %p101 = por %p99, %p100
      %p102 = scmp.ne.s32.totalorder %s91, %s92
      %p103 = scmp.eq.s32.totalorder %s20, 0
      %p104 = por %p102, %p103
      %p105 = scmp.ne.s32.totalorder %s91, %s92
      %p106 = scmp.eq.s32.totalorder %s21, 1
      %p107 = por %p105, %p106
      %p109 = scmp.ne.s32.totalorder %s92, %s108
      %p110 = scmp.eq.s32.totalorder %s21, 0
      %p111 = por %p109, %p110
      %p112 = scmp.le.s32.totalorder 1, %s15
      %p113 = scmp.lt.s32.totalorder %s15, 3
      %p114 = pnand %p112, %p113
      %p115 = pneg %p114
      // Predicated region
      $region9: #{tpu_custom_call.1} parent=5 // pred_check
        _
      $region10: #{tpu_custom_call.1} parent=5 // pred_check_branch
        %117 = sbr.rel (%p114) target = $region12
      $region11: #{tpu_custom_call.1} parent=5 // pred_region
        %s118 = ssub.s32 %s15, 1
        // Predicated region
        $region13: #{tpu_custom_call.1} parent=11 // pred_check
          %p119 = pneg %p48
        $region14: #{tpu_custom_call.1} parent=11 // pred_check_branch
          %121 = sbr.rel (%p119) target = $region16
        $region15: #{tpu_custom_call.1} parent=11 // pred_region
          %s123 = ssub.s32 64, 64
          %124 = vsyncadd [#allocation3], %s123
          %s126 = sshll.u32 [#allocation2], 4
          %s127 = int_to_ptr.vmem [resolvable:$true] %s126
          %129 = dma.hbm_to_vmem [thread:$0]  %s0, 64, %s127, [#allocation3]
        $region16: #{tpu_custom_call.1} parent=11 // pred_fallthru
          _
      $region12: #{tpu_custom_call.1} parent=5 // pred_fallthru
        _
      %p130 = scmp.lt.s32.totalorder %s15, 2
      // Predicated region
      $region17: #{tpu_custom_call.1} parent=5 // pred_check
        %p131 = pneg %p130
      $region18: #{tpu_custom_call.1} parent=5 // pred_check_branch
        %133 = sbr.rel (%p131) target = $region20
      $region19: #{tpu_custom_call.1} parent=5 // pred_region
        // Predicated region
        $region21: #{tpu_custom_call.1} parent=19 // pred_check
          %p134 = pneg %p70
        $region22: #{tpu_custom_call.1} parent=19 // pred_check_branch
          %136 = sbr.rel (%p134) target = $region24
        $region23: #{tpu_custom_call.1} parent=19 // pred_region
          %s137 = sand.u32 %s60, 1
          %s138 = scalar_lea.sflag [#allocation6], %s137
          %s139 = sand.u32 %s60, 1
          %s140 = smul.addr %s139, 128
          %s141 = scalar_lea.vmem [#allocation5], %s140
          %s142 = smul.u32 2, %s23
          %s144 = ssub.s32 2048, 2048
          %145 = vsyncadd %s138, %s144
          %s146 = smul.addr %s22, 32
          %s147 = sadd.s32 %s142, %s146
          %s148 = smul.addr %s147, 64
          %s149 = scalar_lea.hbm %s1, %s148
          %s150 = sshll.u32 %s141, 4
          %s151 = int_to_ptr.vmem [resolvable:$true] %s150
          %156 = dma.hbm_to_vmem [thread:$0]  %s149, 2048, %s151, %s138, 128, 128, 8
        $region24: #{tpu_custom_call.1} parent=19 // pred_fallthru
          _
      $region20: #{tpu_custom_call.1} parent=5 // pred_fallthru
        _
      %p157 = scmp.le.s32.totalorder 1, %s15
      %p158 = scmp.lt.s32.totalorder %s15, 3
      %p159 = pnand %p157, %p158
      %p160 = pneg %p159
      // Predicated region
      $region25: #{tpu_custom_call.1} parent=5 // pred_check
        _
      $region26: #{tpu_custom_call.1} parent=5 // pred_check_branch
        %162 = sbr.rel (%p159) target = $region28
      $region27: #{tpu_custom_call.1} parent=5 // pred_region
        %s163 = ssub.s32 %s15, 1
        // Predicated region
        $region29: #{tpu_custom_call.1} parent=27 // pred_check
          %p164 = pneg %p48
        $region30: #{tpu_custom_call.1} parent=27 // pred_check_branch
          %166 = sbr.rel (%p164) target = $region32
        $region31: #{tpu_custom_call.1} parent=27 // pred_region
          %167 = dma.done [#allocation3], 64
        $region32: #{tpu_custom_call.1} parent=27 // pred_fallthru
          _
        %s168 = sand.u32 %s63, 1
        %s169 = scalar_lea.sflag [#allocation6], %s168
        %s170 = sand.u32 %s63, 1
        %s171 = smul.addr %s170, 128
        %s172 = scalar_lea.vmem [#allocation5], %s171
        // Predicated region
        $region33: #{tpu_custom_call.1} parent=27 // pred_check
          %p173 = pneg %p76
        $region34: #{tpu_custom_call.1} parent=27 // pred_check_branch
          %175 = sbr.rel (%p173) target = $region36
        $region35: #{tpu_custom_call.1} parent=27 // pred_region
          %176 = dma.done %s169, 2048
        $region36: #{tpu_custom_call.1} parent=27 // pred_fallthru
          _
        %p177 = pneg %p48
        %p178 = pneg %p45
        %s179 = sand.u32 %s63, 1
        %s180 = scalar_lea.sflag [#allocation6], %s179
        %s181 = sand.u32 %s63, 1
        %s182 = smul.addr %s181, 128
        %s183 = scalar_lea.vmem [#allocation5], %s182
        %p184 = pneg %p76
        %p185 = pneg %p73
        %p186 = pneg %p104
        %p187 = pneg %p101
        %s188 = sand.u32 %s91, 1
        %s189 = scalar_lea.sflag [#allocation4], %s188
        %s190 = sand.u32 %s91, 1
        %s191 = smul.addr %s190, 16
        %s192 = scalar_lea.vmem [#allocation7], %s191
        %s193 = smul.u32 2, %s25
        %s194 = smul.u32 2, %s25
        %v196 = vld [vmem:[#allocation2] sm:$0xf]
        %v197 = vld [vmem:[%s172] sm:$0xff]
        %v198 = vld [vmem:[%s172 + $0x8] sm:$0xff]
        %v199 = vld [vmem:[%s172 + $0x10] sm:$0xff]
        %v200 = vld [vmem:[%s172 + $0x18] sm:$0xff]
        %v201 = vld [vmem:[%s172 + $0x20] sm:$0xff]
        %v202 = vld [vmem:[%s172 + $0x28] sm:$0xff]
        %v203 = vld [vmem:[%s172 + $0x30] sm:$0xff]
        %v204 = vld [vmem:[%s172 + $0x38] sm:$0xff]
        %v205 = vld [vmem:[%s172 + $0x40] sm:$0xff]
        %v206 = vld [vmem:[%s172 + $0x48] sm:$0xff]
        %v207 = vld [vmem:[%s172 + $0x50] sm:$0xff]
        %v208 = vld [vmem:[%s172 + $0x58] sm:$0xff]
        %v209 = vld [vmem:[%s172 + $0x60] sm:$0xff]
        %v210 = vld [vmem:[%s172 + $0x68] sm:$0xff]
        %v211 = vld [vmem:[%s172 + $0x70] sm:$0xff]
        %v212 = vld [vmem:[%s172 + $0x78] sm:$0xff]
        %v229 = vunpack.c.l.b16 %v197
        %v230 = vunpack.c.h.b16 %v197
        %v231 = vunpack.c.l.b16 %v198
        %v232 = vunpack.c.h.b16 %v198
        %v233 = vunpack.c.l.b16 %v199
        %v234 = vunpack.c.h.b16 %v199
        %v235 = vunpack.c.l.b16 %v200
        %v236 = vunpack.c.h.b16 %v200
        %v237 = vunpack.c.l.b16 %v201
        %v238 = vunpack.c.h.b16 %v201
        %v239 = vunpack.c.l.b16 %v202
        %v240 = vunpack.c.h.b16 %v202
        %v241 = vunpack.c.l.b16 %v203
        %v242 = vunpack.c.h.b16 %v203
        %v243 = vunpack.c.l.b16 %v204
        %v244 = vunpack.c.h.b16 %v204
        %v245 = vunpack.c.l.b16 %v205
        %v246 = vunpack.c.h.b16 %v205
        %v247 = vunpack.c.l.b16 %v206
        %v248 = vunpack.c.h.b16 %v206
        %v249 = vunpack.c.l.b16 %v207
        %v250 = vunpack.c.h.b16 %v207
        %v251 = vunpack.c.l.b16 %v208
        %v252 = vunpack.c.h.b16 %v208
        %v253 = vunpack.c.l.b16 %v209
        %v254 = vunpack.c.h.b16 %v209
        %v255 = vunpack.c.l.b16 %v210
        %v256 = vunpack.c.h.b16 %v210
        %v257 = vunpack.c.l.b16 %v211
        %v258 = vunpack.c.h.b16 %v211
        %v259 = vunpack.c.l.b16 %v212
        %v260 = vunpack.c.h.b16 %v212
        %v261 = vpack.c.b16 %v231, %v229
        %v262 = vpack.c.b16 %v232, %v230
        %v263 = vpack.c.b16 %v235, %v233
        %v264 = vpack.c.b16 %v236, %v234
        %v265 = vpack.c.b16 %v239, %v237
        %v266 = vpack.c.b16 %v240, %v238
        %v267 = vpack.c.b16 %v243, %v241
        %v268 = vpack.c.b16 %v244, %v242
        %v269 = vpack.c.b16 %v247, %v245
        %v270 = vpack.c.b16 %v248, %v246
        %v271 = vpack.c.b16 %v251, %v249
        %v272 = vpack.c.b16 %v252, %v250
        %v273 = vpack.c.b16 %v255, %v253
        %v274 = vpack.c.b16 %v256, %v254
        %v275 = vpack.c.b16 %v259, %v257
        %v276 = vpack.c.b16 %v260, %v258
        %293 = vmatprep.subr.bf16.mxu0 %v276
        %294 = vmatpush1.bf16.msra.mxu0 %v275
        %295 = vmatprep.subr.bf16.mxu0 %v274
        %296 = vmatpush1.bf16.msra.mxu0 %v273
        %297 = vmatprep.subr.bf16.mxu0 %v272
        %298 = vmatpush1.bf16.msra.mxu0 %v271
        %299 = vmatprep.subr.bf16.mxu0 %v270
        %300 = vmatpush1.bf16.msra.mxu0 %v269
        %301 = vmatprep.subr.bf16.mxu0 %v268
        %302 = vmatpush1.bf16.msra.mxu0 %v267
        %303 = vmatprep.subr.bf16.mxu0 %v266
        %304 = vmatpush1.bf16.msra.mxu0 %v265
        %305 = vmatprep.subr.bf16.mxu0 %v264
        %306 = vmatpush1.bf16.msra.mxu0 %v263
        %307 = vmatprep.subr.bf16.mxu0 %v262
        %308 = vmatpush1.bf16.msra.mxu0 %v261
        %309 = vmatprep.subr.bf16.mxu0 0
        %310 = vmatpush2.bf16.msra.mxu0 0
        %311 = vmatprep.subr.bf16.mxu0 0
        %312 = vmatpush2.bf16.msra.mxu0 0
        %313 = vmatprep.subr.bf16.mxu0 0
        %314 = vmatpush2.bf16.msra.mxu0 0
        %315 = vmatprep.subr.bf16.mxu0 0
        %316 = vmatpush2.bf16.msra.mxu0 0
        %317 = vmatprep.subr.bf16.mxu0 0
        %318 = vmatpush2.bf16.msra.mxu0 0
        %319 = vmatprep.subr.bf16.mxu0 0
        %320 = vmatpush2.bf16.msra.mxu0 0
        %321 = vmatprep.subr.bf16.mxu0 0
        %322 = vmatpush2.bf16.msra.mxu0 0
        %323 = vmatprep.subr.bf16.mxu0 0
        %324 = vmatpush2.bf16.msra.mxu0 0
        %325 = vmatprep.mubr.bf16.mxu0 0
        %326 = vmatmul.mubr.bf16.gmra.mxu0 %v196
        %v327 = vpop.f32.mrf.mxu0
        %v328 = vadd.f32 0.0, %v327
        %v329 = vpop.f32.mrf.mxu0
        %v330 = vadd.f32 0.0, %v329
        %v331 = vpop.f32.mrf.mxu0
        %v332 = vpop.f32.mrf.mxu0
        %333 = vdwg.mxu0
        %334 = vst [vmem:[%s192] sm:$0xff] %v328
        %335 = vst [vmem:[%s192 + $0x8] sm:$0xff] %v330
        %s336 = sand.u32 %s91, 1
        %s337 = scalar_lea.sflag [#allocation4], %s336
        %s338 = sand.u32 %s91, 1
        %s339 = smul.addr %s338, 16
        %s340 = scalar_lea.vmem [#allocation7], %s339
        // Predicated region
        $region37: #{tpu_custom_call.1} parent=27 // pred_check
          %p341 = pneg %p101
        $region38: #{tpu_custom_call.1} parent=27 // pred_check_branch
          %343 = sbr.rel (%p341) target = $region40
        $region39: #{tpu_custom_call.1} parent=27 // pred_region
          %s344 = smul.u32 2, %s25
          %s346 = ssub.s32 256, 256
          %347 = vsyncadd %s337, %s346
          %s348 = smul.addr %s24, 2
          %s349 = sadd.s32 %s344, %s348
          %s350 = smul.addr %s349, 128
          %s351 = scalar_lea.hbm %s2, %s350
          %s353 = sshll.u32 %s340, 4
          %s354 = int_to_ptr.vmem [resolvable:$true] %s353
          %356 = dma.vmem_to_hbm [thread:$0]  %s354, 256, %s351, %s337
        $region40: #{tpu_custom_call.1} parent=27 // pred_fallthru
          _
      $region28: #{tpu_custom_call.1} parent=5 // pred_fallthru
        _
      %p357 = scmp.le.s32.totalorder 2, %s15
      // Predicated region
      $region41: #{tpu_custom_call.1} parent=5 // pred_check
        %p358 = pneg %p357
      $region42: #{tpu_custom_call.1} parent=5 // pred_check_branch
        %360 = sbr.rel (%p358) target = $region44
      $region43: #{tpu_custom_call.1} parent=5 // pred_region
        %s361 = ssub.s32 %s15, 2
        // Predicated region
        $region45: #{tpu_custom_call.1} parent=43 // pred_check
          %p362 = pneg %p107
        $region46: #{tpu_custom_call.1} parent=43 // pred_check_branch
          %364 = sbr.rel (%p362) target = $region48
        $region47: #{tpu_custom_call.1} parent=43 // pred_region
          %s365 = sand.u32 %s92, 1
          %s366 = scalar_lea.sflag [#allocation4], %s365
          %s367 = sand.u32 %s92, 1
          %s368 = smul.addr %s367, 16
          %s369 = scalar_lea.vmem [#allocation7], %s368
          %370 = dma.done %s366, 256
        $region48: #{tpu_custom_call.1} parent=43 // pred_fallthru
          _
      $region44: #{tpu_custom_call.1} parent=5 // pred_fallthru
        _
    $region6: #{tpu_custom_call.1} parent=1 // loop_footer
      %s19 = sadd.s32 1, %s15
    $region7: #{tpu_custom_call.1} parent=1 // loop_footer_branch
      %14 = sbr.rel target = $region3
    $region8: #{tpu_custom_call.1} parent=1 // loop_exit
      _
    %371 = vsyncpa [#allocation3], 1
    %s372 = scalar_lea.sflag [#allocation3], 1
    %373 = vsyncpa %s372, 1
    %374 = vsyncpa [#allocation6], 1
    %s375 = scalar_lea.sflag [#allocation6], 1
    %376 = vsyncpa %s375, 1
    %377 = vsyncpa [#allocation4], 1
    %s378 = scalar_lea.sflag [#allocation4], 1
    %379 = vsyncpa %s378, 1

</llo_original>
